<compile_context>
chip_gen: v5e
topology: v5e:2x2
jax: 0.10.0
libtpu: 0.0.40
codegen_flags: <defaults>
</compile_context>

<pallas_src>
import functools

import jax
import jax.numpy as jnp
from jax.experimental import pallas as pl
from jax.experimental.pallas import tpu as pltpu


_VMEM_LIMIT_BYTES = 48 * 1024 * 1024     # scoped-VMEM limit handed to Mosaic
_FUSED_BUDGET_BYTES = 40 * 1024 * 1024   # per-step (in+out, double-buffered) budget
_TWO_PHASE_TILE_T = 8192                 # default time tile for the gating kernel


# ---------------------------------------------------------------------------
# Path 1: fused single-pass kernel (mean + Linear + sigmoid + gate)
# ---------------------------------------------------------------------------
def _fms_fused_kernel(x_ref, wt_ref, b_ref, o_ref, *, inv_t):
    # x_ref: (Bt, C, T)  wt_ref: (C, C) = W^T  b_ref: (1, C)  o_ref: (Bt, C, T)
    # Mean over time: lane reduction with f32 accumulation; the upcast fuses
    # into the reduce so no (Bt, C, T) f32 temp is materialized.
    m = jnp.sum(x_ref[...], axis=-1, dtype=jnp.float32) * inv_t          # (Bt, C)

    # torch Linear + sigmoid for all Bt rows in one MXU matmul:
    #   gates[b, i] = sigmoid(sum_j m[b, j] * W[i, j] + bias[i]) = m @ W^T + b
    gates = jax.nn.sigmoid(
        jnp.dot(m, wt_ref[...].astype(jnp.float32),
                preferred_element_type=jnp.float32)
        + b_ref[...].astype(jnp.float32))                                 # (Bt, C)
    s = gates[:, :, None].astype(x_ref.dtype)                            # (Bt, C, 1)

    # Elementwise gate, streamed straight from x_ref (single resident tile).
    o_ref[...] = ((x_ref[...] + 1) * s).astype(o_ref.dtype)


def _fms_fused(x, w, b, bt):
    B, C, T = x.shape
    kernel = functools.partial(_fms_fused_kernel, inv_t=1.0 / T)
    return pl.pallas_call(
        kernel,
        out_shape=jax.ShapeDtypeStruct((B, C, T), x.dtype),
        grid=(B // bt,),
        in_specs=[
            pl.BlockSpec((bt, C, T), lambda i: (i, 0, 0)),   # x (per-step batch tile)
            pl.BlockSpec((C, C), lambda i: (0, 0)),          # W^T
            pl.BlockSpec((1, C), lambda i: (0, 0)),          # bias
        ],
        out_specs=pl.BlockSpec((bt, C, T), lambda i: (i, 0, 0)),
        compiler_params=pltpu.CompilerParams(
            dimension_semantics=("parallel",),
            vmem_limit_bytes=_VMEM_LIMIT_BYTES),
    )(x, w.T, b.reshape(1, C))


# ---------------------------------------------------------------------------
# Path 2: two-phase (tiny gate computation in XLA + T-tiled gating kernel)
# ---------------------------------------------------------------------------
def _fms_gate_kernel(s_ref, x_ref, o_ref):
    # s_ref: (1, C, 1)   x_ref: (1, C, tT)   o_ref: (1, C, tT)
    s = s_ref[0].astype(x_ref.dtype)                                      # (C, 1)
    o_ref[0] = ((x_ref[0] + 1) * s).astype(o_ref.dtype)


def _fms_two_phase(x, w, b, tile_t):
    B, C, T = x.shape
    # Phase 1 (tiny, one read pass over x): per-(B, C) gates in plain XLA.
    m = jnp.mean(x, axis=-1, dtype=jnp.float32)                           # (B, C)
    s = jax.nn.sigmoid(
        m @ w.astype(jnp.float32).T + b.astype(jnp.float32)[None])        # (B, C)
    s = s.reshape(B, C, 1)

    # Phase 2: elementwise, lane-dense, T-tiled gating.  Boundary blocks may
    # extend past T: out-of-bounds reads are unused and out-of-bounds writes
    # are discarded by the pipeline (elementwise op, no contamination).
    t_t = min(tile_t, pl.cdiv(T, 128) * 128)       # multiple of 128, lane-dense
    n_t = pl.cdiv(T, t_t)
    return pl.pallas_call(
        _fms_gate_kernel,
        out_shape=jax.ShapeDtypeStruct((B, C, T), x.dtype),
        grid=(B, n_t),
        in_specs=[
            pl.BlockSpec((1, C, 1), lambda i, j: (i, 0, 0)),     # gates
            pl.BlockSpec((1, C, t_t), lambda i, j: (i, 0, j)),   # x time tile
        ],
        out_specs=pl.BlockSpec((1, C, t_t), lambda i, j: (i, 0, j)),
        compiler_params=pltpu.CompilerParams(
            dimension_semantics=("parallel", "parallel"),
            vmem_limit_bytes=_VMEM_LIMIT_BYTES),
    )(s, x)


# ---------------------------------------------------------------------------
# Public wrapper
# ---------------------------------------------------------------------------
def fms(x, w, b, *, force_two_phase=False, tile_t=_TWO_PHASE_TILE_T):
    """FMS forward. x: (B, C, T); w: (C, C) torch Linear weight (out, in); b: (C,)."""
    B, C, T = x.shape
    assert w.shape == (C, C) and b.shape == (C,)

    itemsize = jnp.dtype(x.dtype).itemsize
    # Per-grid-step VMEM bytes for `bt` packed batch elements: input + output
    # tile, each double-buffered by the pipeline.
    step_bytes = lambda bt: 4 * bt * C * T * itemsize

    if force_two_phase or step_bytes(1) > _FUSED_BUDGET_BYTES:
        return _fms_two_phase(x, w, b, tile_t)

    # Pack batch elements per step (amortize per-step overhead, one wider MXU
    # matmul) while keeping >=2 grid steps when B >= 2 (v7x has 2 TensorCores).
    bt = 1
    for cand in range(B, 0, -1):
        if B % cand != 0 or step_bytes(cand) > _FUSED_BUDGET_BYTES:
            continue
        if B // cand >= 2 or B == 1:
            bt = cand
            break
    return _fms_fused(x, w, b, bt)


# ---------------------------------------------------------------------------
# Pure-JAX reference (mirrors the PyTorch FMS module)
# ---------------------------------------------------------------------------
def fms_ref(x, w, b):
    m = x.mean(-1)                                  # (B, C)
    s = jax.nn.sigmoid(m @ w.T + b[None])           # (B, C)
    return (x + 1.0) * s[:, :, None]


if __name__ == "__main__":
    key = jax.random.PRNGKey(0)

    def check(B, C, T, **kw):
        kx, kw_, kb = jax.random.split(jax.random.fold_in(key, B * 1000 + T), 3)
        x = jax.random.normal(kx, (B, C, T), jnp.float32)
        w = 0.3 * jax.random.normal(kw_, (C, C), jnp.float32)
        b = 0.1 * jax.random.normal(kb, (C,), jnp.float32)
        out = jax.block_until_ready(fms(x, w, b, **kw))
        ref = fms_ref(x, w, b)
        assert out.shape == x.shape, out.shape
        err = float(jnp.max(jnp.abs(out - ref)))
        assert jnp.allclose(out, ref, atol=1e-5, rtol=1e-5), err

    # Fused single-pass path (T deliberately not 128-aligned; no pad / slice).
    check(2, 32, 200)
    # Fused path with 2 batch elements packed per grid step (one (2,C)@(C,C) gate matmul).
    check(4, 32, 96)
    # Two-phase T-tiled path, forced with a small tile to exercise the boundary block.
    check(2, 32, 200, force_two_phase=True, tile_t=128)

    print("KERNEL_OK")
</pallas_src>

<mosaic_0001>
module attributes {stable_mosaic.version = 11 : i64} {
  func.func @_fms_fused_kernel(%arg0: i32, %arg1: memref<1x32x200xf32, #tpu.memory_space<vmem>>, %arg2: memref<32x32xf32, #tpu.memory_space<vmem>>, %arg3: memref<1x32xf32, #tpu.memory_space<vmem>>, %arg4: memref<1x32x200xf32, #tpu.memory_space<vmem>>) attributes {dimension_semantics = [#tpu.dimension_semantics<parallel>], iteration_bounds = array<i64: 2>, scalar_prefetch = 0 : i64, scratch_operands = 0 : i64, tpu.core_type = #tpu.core_type<tc>, window_params = [{transform_indices = @transform_0, window_bounds = array<i64: 1, 32, 200>}, {pipeline_mode = #tpu.pipeline_mode<synchronous>, transform_indices = @transform_1, window_bounds = array<i64: 32, 32>}, {pipeline_mode = #tpu.pipeline_mode<synchronous>, transform_indices = @transform_2, window_bounds = array<i64: 1, 32>}, {transform_indices = @transform_3, window_bounds = array<i64: 1, 32, 200>}]} {
    %c0 = arith.constant 0 : index
    %c0_0 = arith.constant 0 : index
    %c0_1 = arith.constant 0 : index
    %0 = vector.load %arg1[%c0, %c0_0, %c0_1] : memref<1x32x200xf32, #tpu.memory_space<vmem>>, vector<1x32x200xf32>
    %cst = arith.constant dense<0.000000e+00> : vector<1x32xf32>
    %1 = vector.multi_reduction <add>, %0, %cst [2] : vector<1x32x200xf32> to vector<1x32xf32>
    %cst_2 = arith.constant 5.000000e-03 : f32
    %2 = vector.broadcast %cst_2 : f32 to vector<1x32xf32>
    %3 = arith.mulf %1, %2 : vector<1x32xf32>
    %c0_3 = arith.constant 0 : index
    %c0_4 = arith.constant 0 : index
    %4 = vector.load %arg2[%c0_3, %c0_4] : memref<32x32xf32, #tpu.memory_space<vmem>>, vector<32x32xf32>
    %cst_5 = arith.constant dense<0.000000e+00> : vector<1x32xf32>
    %5 = tpu.matmul %3, %4, %cst_5 {dimension_numbers = #tpu.dot_dimension_numbers<[1], [0], [0], [1], [0, 0, 1, 1], [], []>} : vector<1x32xf32>, vector<32x32xf32>, vector<1x32xf32> -> vector<1x32xf32>
    %c0_6 = arith.constant 0 : index
    %c0_7 = arith.constant 0 : index
    %6 = vector.load %arg3[%c0_6, %c0_7] : memref<1x32xf32, #tpu.memory_space<vmem>>, vector<1x32xf32>
    %7 = arith.addf %5, %6 : vector<1x32xf32>
    %8 = arith.negf %7 : vector<1x32xf32>
    %9 = math.exp %8 : vector<1x32xf32>
    %cst_8 = arith.constant 1.000000e+00 : f32
    %10 = vector.broadcast %cst_8 : f32 to vector<1x32xf32>
    %11 = arith.addf %10, %9 : vector<1x32xf32>
    %12 = arith.divf %10, %11 : vector<1x32xf32>
    %13 = vector.shape_cast %12 : vector<1x32xf32> to vector<1x32x1xf32>
    %c0_9 = arith.constant 0 : index
    %c0_10 = arith.constant 0 : index
    %c0_11 = arith.constant 0 : index
    %14 = vector.load %arg1[%c0_9, %c0_10, %c0_11] : memref<1x32x200xf32, #tpu.memory_space<vmem>>, vector<1x32x200xf32>
    %cst_12 = arith.constant 1.000000e+00 : f32
    %15 = vector.broadcast %cst_12 : f32 to vector<1x32x200xf32>
    %16 = arith.addf %14, %15 : vector<1x32x200xf32>
    %17 = vector.broadcast %13 : vector<1x32x1xf32> to vector<1x32x200xf32>
    %18 = arith.mulf %16, %17 : vector<1x32x200xf32>
    %c0_13 = arith.constant 0 : index
    %c0_14 = arith.constant 0 : index
    %c0_15 = arith.constant 0 : index
    %19 = vector.load %arg4[%c0_13, %c0_14, %c0_15] : memref<1x32x200xf32, #tpu.memory_space<vmem>>, vector<1x32x200xf32>
    tpu.vector_store %arg4[%c0_13, %c0_14, %c0_15], %18 {strides = array<i32>} : memref<1x32x200xf32, #tpu.memory_space<vmem>>, vector<1x32x200xf32>,
    return
  }
  func.func @transform_0(%arg0: i32) -> (i32, i32, i32) {
    %c0_i32 = arith.constant 0 : i32
    %c0_i32_0 = arith.constant 0 : i32
    %c0_i32_1 = arith.constant 0 : i32
    return %arg0, %c0_i32, %c0_i32_0 : i32, i32, i32
  }
  func.func @transform_1(%arg0: i32) -> (i32, i32) {
    %c0_i32 = arith.constant 0 : i32
    %c0_i32_0 = arith.constant 0 : i32
    %c0_i32_1 = arith.constant 0 : i32
    return %c0_i32, %c0_i32_0 : i32, i32
  }
  func.func @transform_2(%arg0: i32) -> (i32, i32) {
    %c0_i32 = arith.constant 0 : i32
    %c0_i32_0 = arith.constant 0 : i32
    %c0_i32_1 = arith.constant 0 : i32
    return %c0_i32, %c0_i32_0 : i32, i32
  }
  func.func @transform_3(%arg0: i32) -> (i32, i32, i32) {
    %c0_i32 = arith.constant 0 : i32
    %c0_i32_0 = arith.constant 0 : i32
    %c0_i32_1 = arith.constant 0 : i32
    return %arg0, %c0_i32, %c0_i32_0 : i32, i32, i32
  }
}

</mosaic_0001>

<llo_original>
// kernel: tpu_custom_call.1
$region0: #{tpu_custom_call.1}
  #allocation0 [shape = 'u32[]', space=smem, size = 0x4, offset = 0x4, fixed_abs, tag = 'smem constant byte address 0x4 - core index']
  #allocation1 [shape = 'u32[72,128]{1,0:T(1,128)}', space=vmem, size = 0x9000, scoped, tag = 'internal scratch']
  %s0 = inlined_call_operand.hbm [shape: f32[2,32,200], index: 0, kind: input, shape index: {}]
  %s1 = inlined_call_operand.hbm [shape: f32[32,32], index: 1, kind: input, shape index: {}]
  %s2 = inlined_call_operand.vmem [shape: f32[1,32], index: 2, kind: input, shape index: {}]
  %s3 = inlined_call_operand.hbm [shape: f32[2,32,200], index: 3, kind: output, shape index: {}]
  %s4 = sld [smem:[#allocation0]]
  $region53: #{tpu_custom_call.1} parent=0
    _
  %s6 = ssub.s32 1, %s4
  %s7 = scalar_select 0, %s6, %s4
  $region1: #{tpu_custom_call.1} parent=0
    #allocation2 [shape = 'u8[65536]{0}', space=vmem, size = 0x10000, scoped, tag = 'input window, operand 0']
    #allocation3 [shape = 's32[2]{0}', space=sflag, size = 0x8, scoped, tag = 'scoped memory for tpu_custom_call.1']
    #allocation4 [shape = 's32[2]{0}', space=sflag, size = 0x8, scoped, tag = 'scoped memory for tpu_custom_call.1']
    #allocation5 [shape = 'u8[16384]{0}', space=vmem, size = 0x4000, scoped, tag = 'input window, operand 1, single buffered']
    #allocation6 [shape = 's32[1]{0}', space=sflag, size = 0x4, scoped, tag = 'scoped memory for tpu_custom_call.1']
    #allocation7 [shape = 'u8[65536]{0}', space=vmem, size = 0x10000, scoped, tag = 'output window, operand 0']
    %8 = vsyncpa [#allocation3], 0
    %s9 = scalar_lea.sflag [#allocation3], 1
    %10 = vsyncpa %s9, 0
    %11 = vsyncpa [#allocation6], 0
    %12 = vsyncpa [#allocation4], 0
    %s13 = scalar_lea.sflag [#allocation4], 1
    %14 = vsyncpa %s13, 0
    loop: start=0, step=1, limit=4
    $region2: #{tpu_custom_call.1} parent=1 // loop_pre_header
      _
    $region3: #{tpu_custom_call.1} parent=1 // loop_header
      %s16 = sphi 0, %s20
      %p17 = scmp.ge.s32.totalorder %s16, 4
      %s26 = sphi 0, %s28
      %s29 = sphi 0, %s26
      %s30 = sphi 0, %s29
      %s46 = sphi 0, %s30
      %s50 = sphi 0, %s50
      %s52 = sphi 0, %s50
      %s53 = sphi 0, %s52
      %s67 = sphi 0, %s53
      %s71 = sphi 0, %s71
      %s73 = sphi 0, %s71
      %s74 = sphi 0, %s73
      %s88 = sphi 0, %s74
      %s94 = sphi 0, %s96
      %s97 = sphi 0, %s94
      %s98 = sphi 0, %s97
      %s114 = sphi 0, %s98
    $region4: #{tpu_custom_call.1} parent=1 // loop_header_branch
      %19 = sbr.rel (%p17) target = $region8
    $region5: #{tpu_custom_call.1} parent=1 // loop_body
      %s21 = ssub.s32 %s16, 1
      %s22 = ssub.s32 %s16, 2
      %s23 = sadd.s32 %s16, 1
      %s24 = ssub.s32 %s16, %s23
      %p25 = scmp.eq.s32.totalorder %s24, 0
      %s27 = sadd.s32 %s26, 1
      %s28 = scalar_select %p25, %s26, %s27
      %p31 = pneg %p25
      %p32 = scmp.eq.s32.totalorder %s16, 1
      %p33 = por %p31, %p32
      %p34 = scmp.ne.s32.totalorder %s26, %s29
      %p35 = scmp.eq.s32.totalorder %s16, 0
      %p36 = por %p34, %p35
      %p37 = scmp.ne.s32.totalorder %s26, %s29
      %p38 = scmp.eq.s32.totalorder %s21, 1
      %p39 = por %p37, %p38
      %p40 = scmp.ne.s32.totalorder %s29, %s30
      %p41 = scmp.eq.s32.totalorder %s21, 0
      %p42 = por %p40, %p41
      %p43 = scmp.ne.s32.totalorder %s29, %s30
      %p44 = scmp.eq.s32.totalorder %s22, 1
      %p45 = por %p43, %p44
      %p47 = scmp.ne.s32.totalorder %s30, %s46
      %p48 = scmp.eq.s32.totalorder %s22, 0
      %p49 = por %p47, %p48
      %s51 = sadd.s32 %s50, 1
      %p54 = scmp.eq.s32.totalorder %s16, 1
      %p55 = scmp.ne.s32.totalorder %s50, %s52
      %p56 = scmp.eq.s32.totalorder %s16, 0
      %p57 = por %p55, %p56
      %p58 = scmp.ne.s32.totalorder %s50, %s52
      %p59 = scmp.eq.s32.totalorder %s21, 1
      %p60 = por %p58, %p59
      %p61 = scmp.ne.s32.totalorder %s52, %s53
      %p62 = scmp.eq.s32.totalorder %s21, 0
      %p63 = por %p61, %p62
      %p64 = scmp.ne.s32.totalorder %s52, %s53
      %p65 = scmp.eq.s32.totalorder %s22, 1
      %p66 = por %p64, %p65
      %p68 = scmp.ne.s32.totalorder %s53, %s67
      %p69 = scmp.eq.s32.totalorder %s22, 0
      %p70 = por %p68, %p69
      %s72 = sadd.s32 %s71, 1
      %p75 = scmp.eq.s32.totalorder %s16, 1
      %p76 = scmp.ne.s32.totalorder %s71, %s73
      %p77 = scmp.eq.s32.totalorder %s16, 0
      %p78 = por %p76, %p77
      %p79 = scmp.ne.s32.totalorder %s71, %s73
      %p80 = scmp.eq.s32.totalorder %s21, 1
      %p81 = por %p79, %p80
      %p82 = scmp.ne.s32.totalorder %s73, %s74
      %p83 = scmp.eq.s32.totalorder %s21, 0
      %p84 = por %p82, %p83
      %p85 = scmp.ne.s32.totalorder %s73, %s74
      %p86 = scmp.eq.s32.totalorder %s22, 1
      %p87 = por %p85, %p86
      %p89 = scmp.ne.s32.totalorder %s74, %s88
      %p90 = scmp.eq.s32.totalorder %s22, 0
      %p91 = por %p89, %p90
      %s92 = ssub.s32 %s16, %s23
      %p93 = scmp.eq.s32.totalorder %s92, 0
      %s95 = sadd.s32 %s94, 1
      %s96 = scalar_select %p93, %s94, %s95
      %p99 = pneg %p93
      %p100 = scmp.eq.s32.totalorder %s16, 1
      %p101 = por %p99, %p100
      %p102 = scmp.ne.s32.totalorder %s94, %s97
      %p103 = scmp.eq.s32.totalorder %s16, 0
      %p104 = por %p102, %p103
      %p105 = scmp.ne.s32.totalorder %s94, %s97
      %p106 = scmp.eq.s32.totalorder %s21, 1
      %p107 = por %p105, %p106
      %p108 = scmp.ne.s32.totalorder %s97, %s98
      %p109 = scmp.eq.s32.totalorder %s21, 0
      %p110 = por %p108, %p109
      %p111 = scmp.ne.s32.totalorder %s97, %s98
      %p112 = scmp.eq.s32.totalorder %s22, 1
      %p113 = por %p111, %p112
      %p115 = scmp.ne.s32.totalorder %s98, %s114
      %p116 = scmp.eq.s32.totalorder %s22, 0
      %p117 = por %p115, %p116
      %p118 = scmp.le.s32.totalorder 1, %s16
      %p119 = scmp.lt.s32.totalorder %s16, 3
      %p120 = pnand %p118, %p119
      %p121 = pneg %p120
      // Predicated region
      $region9: #{tpu_custom_call.1} parent=5 // pred_check
        _
      $region10: #{tpu_custom_call.1} parent=5 // pred_check_branch
        %123 = sbr.rel (%p120) target = $region12
      $region11: #{tpu_custom_call.1} parent=5 // pred_region
        %s124 = ssub.s32 %s16, 1
        // Predicated region
        $region13: #{tpu_custom_call.1} parent=11 // pred_check
          %p125 = pneg %p63
        $region14: #{tpu_custom_call.1} parent=11 // pred_check_branch
          %127 = sbr.rel (%p125) target = $region16
        $region15: #{tpu_custom_call.1} parent=11 // pred_region
          %129 = vsyncadd [#allocation6], 0
          %s130 = sshll.u32 %s1, 4
          %s131 = int_to_ptr.hbm [resolvable:$true] %s130
          %s132 = sshll.u32 [#allocation5], 4
          %s133 = int_to_ptr.vmem [resolvable:$true] %s132
          %138 = dma.hbm_to_vmem [thread:$0]  %s131, 512, %s133, [#allocation6], 128, 128, 8
        $region16: #{tpu_custom_call.1} parent=11 // pred_fallthru
          _
        // Predicated region
        $region17: #{tpu_custom_call.1} parent=11 // pred_check
          %p139 = pneg %p84
        $region18: #{tpu_custom_call.1} parent=11 // pred_check_branch
          %141 = sbr.rel (%p139) target = $region20
        $region19: #{tpu_custom_call.1} parent=11 // pred_region
          _
        $region20: #{tpu_custom_call.1} parent=11 // pred_fallthru
          _
      $region12: #{tpu_custom_call.1} parent=5 // pred_fallthru
        _
      %p142 = scmp.lt.s32.totalorder %s16, 2
      // Predicated region
      $region21: #{tpu_custom_call.1} parent=5 // pred_check
        %p143 = pneg %p142
      $region22: #{tpu_custom_call.1} parent=5 // pred_check_branch
        %145 = sbr.rel (%p143) target = $region24
      $region23: #{tpu_custom_call.1} parent=5 // pred_region
        // Predicated region
        $region25: #{tpu_custom_call.1} parent=23 // pred_check
          %p146 = pneg %p36
        $region26: #{tpu_custom_call.1} parent=23 // pred_check_branch
          %148 = sbr.rel (%p146) target = $region28
        $region27: #{tpu_custom_call.1} parent=23 // pred_region
          %s149 = sand.u32 %s26, 1
          %s150 = scalar_lea.sflag [#allocation3], %s149
          %s151 = sand.u32 %s26, 1
          %s152 = smul.addr %s151, 64
          %s153 = scalar_lea.vmem [#allocation2], %s152
          %155 = vsyncadd %s150, 0
          %s156 = smul.addr %s16, 8
          %s157 = smul.addr %s156, 8
          %s158 = scalar_lea.hbm %s0, %s157
          %s159 = sshll.u32 %s158, 4
          %s160 = int_to_ptr.hbm [resolvable:$true] %s159
          %s161 = sshll.u32 %s153, 4
          %s162 = int_to_ptr.vmem [resolvable:$true] %s161
          %167 = dma.hbm_to_vmem [thread:$0]  %s160, 1024, %s162, %s150, 256, 256, 16
        $region28: #{tpu_custom_call.1} parent=23 // pred_fallthru
          _
      $region24: #{tpu_custom_call.1} parent=5 // pred_fallthru
        _
      %p168 = scmp.le.s32.totalorder 1, %s16
      %p169 = scmp.lt.s32.totalorder %s16, 3
      %p170 = pnand %p168, %p169
      %p171 = pneg %p170
      // Predicated region
      $region29: #{tpu_custom_call.1} parent=5 // pred_check
        _
      $region30: #{tpu_custom_call.1} parent=5 // pred_check_branch
        %173 = sbr.rel (%p170) target = $region32
      $region31: #{tpu_custom_call.1} parent=5 // pred_region
        %s174 = ssub.s32 %s16, 1
        %s175 = sand.u32 %s29, 1
        %s176 = scalar_lea.sflag [#allocation3], %s175
        %s177 = sand.u32 %s29, 1
        %s178 = smul.addr %s177, 64
        %s179 = scalar_lea.vmem [#allocation2], %s178
        // Predicated region
        $region33: #{tpu_custom_call.1} parent=31 // pred_check
          %p180 = pneg %p42
        $region34: #{tpu_custom_call.1} parent=31 // pred_check_branch
          %182 = sbr.rel (%p180) target = $region36
        $region35: #{tpu_custom_call.1} parent=31 // pred_region
          %184 = dma.done %s176, 1024
        $region36: #{tpu_custom_call.1} parent=31 // pred_fallthru
          _
        // Predicated region
        $region37: #{tpu_custom_call.1} parent=31 // pred_check
          %p185 = pneg %p63
        $region38: #{tpu_custom_call.1} parent=31 // pred_check_branch
          %187 = sbr.rel (%p185) target = $region40
        $region39: #{tpu_custom_call.1} parent=31 // pred_region
          %189 = dma.done [#allocation6], 512
        $region40: #{tpu_custom_call.1} parent=31 // pred_fallthru
          _
        %s190 = sand.u32 %s29, 1
        %s191 = scalar_lea.sflag [#allocation3], %s190
        %s192 = sand.u32 %s29, 1
        %s193 = smul.addr %s192, 64
        %s194 = scalar_lea.vmem [#allocation2], %s193
        %p195 = pneg %p42
        %p196 = pneg %p39
        %p197 = pneg %p63
        %p198 = pneg %p60
        %p199 = pneg %p84
        %p200 = pneg %p81
        %p201 = pneg %p110
        %p202 = pneg %p107
        %s203 = sand.u32 %s97, 1
        %s204 = scalar_lea.sflag [#allocation4], %s203
        %s205 = sand.u32 %s97, 1
        %s206 = smul.addr %s205, 64
        %s207 = scalar_lea.vmem [#allocation7], %s206
        %v208 = vld [vmem:[%s179] sm:$0xff]
        %v209 = vld [vmem:[%s179 + $0x8] sm:$0xff]
        %v210 = vld [vmem:[%s179 + $0x10] sm:$0xff]
        %v211 = vld [vmem:[%s179 + $0x18] sm:$0xff]
        %v212 = vld [vmem:[%s179 + $0x20] sm:$0xff]
        %v213 = vld [vmem:[%s179 + $0x28] sm:$0xff]
        %v214 = vld [vmem:[%s179 + $0x30] sm:$0xff]
        %v215 = vld [vmem:[%s179 + $0x38] sm:$0xff]
        %vm216 = vcmask 588800
        %v217 = vsel %vm216, %v209, 0.0
        %v218 = vadd.f32 %v208, %v217
        %219 = vadd.xlane.f32.xlu0 %v218
        %v220 = vpop.xlane.xlu0 %219
        %v221 = vsel %vm216, %v211, 0.0
        %v222 = vadd.f32 %v210, %v221
        %223 = vadd.xlane.f32.xlu0 %v222
        %v224 = vpop.xlane.xlu0 %223
        %v225 = vsel %vm216, %v213, 0.0
        %v226 = vadd.f32 %v212, %v225
        %227 = vadd.xlane.f32.xlu0 %v226
        %v228 = vpop.xlane.xlu0 %227
        %v229 = vsel %vm216, %v215, 0.0
        %v230 = vadd.f32 %v214, %v229
        %231 = vadd.xlane.f32.xlu0 %v230
        %v232 = vpop.xlane.xlu0 %231
        %v233 = vmul.f32 %v220, 0.005
        %v234 = vmul.f32 %v224, 0.005
        %v235 = vmul.f32 %v228, 0.005
        %v236 = vmul.f32 %v232, 0.005
        %v237 = vld [vmem:[#allocation5] sm:$0xff]
        %v238 = vld [vmem:[#allocation5 + $0x8] sm:$0xff]
        %v239 = vld [vmem:[#allocation5 + $0x10] sm:$0xff]
        %v240 = vld [vmem:[#allocation5 + $0x18] sm:$0xff]
        %v241 = vld [vmem:[%s2] sm:$0x1]
        %v246 = vlaneseq
        %v247 = vand.u32 %v246, 127
        %v248 = vperm.slane %v233, %v247
        %v249 = vadd.s32 %v247, 4294967288
        %v250 = vperm.slane %v234, %v249
        %vm251 = vcmask 130112
        %v252 = vsel %vm251, %v250, %v248
        %v253 = vadd.s32 %v247, 4294967280
        %v254 = vperm.slane %v235, %v253
        %vm255 = vcmask 195712
        %v256 = vsel %vm255, %v254, %v252
        %v257 = vadd.s32 %v247, 4294967272
        %v258 = vperm.slane %v236, %v257
        %vm259 = vcmask 261312
        %v260 = vsel %vm259, %v258, %v256
        %vm261 = vcmask 261120
        %v262 = vsel %vm261, %v260, 0
        %264 = vmatpush.msra.mxu0 0.0
        %265 = vmatpush.msra.mxu0 0.0
        %266 = vmatpush.msra.mxu0 0.0
        %267 = vmatpush.msra.mxu0 0.0
        %268 = vmatpush.msra.mxu0 0.0
        %269 = vmatpush.msra.mxu0 0.0
        %270 = vmatpush.msra.mxu0 0.0
        %271 = vmatpush.msra.mxu0 0.0
        %272 = vmatpush.msra.mxu0 0.0
        %273 = vmatpush.msra.mxu0 0.0
        %274 = vmatpush.msra.mxu0 0.0
        %275 = vmatpush.msra.mxu0 0.0
        %276 = vmatpush.msra.mxu0 %v240
        %277 = vmatpush.msra.mxu0 %v239
        %278 = vmatpush.msra.mxu0 %v238
        %279 = vmatpush.msra.mxu0 %v237
        %280 = vmatmul.f32.gmra.mxu0 %v262
        %v281 = vpop.f32.mrf.mxu0
        %v282 = vadd.f32 %v241, %v281
        %283 = vdwg.mxu0
        %v284 = vxor.u32 %v282, 2147483648
        %v285 = vmul.f32 %v284, 1.442695
        %v286 = vpow.pop %v285
        %v287 = vadd.f32 %v286, 1.0
        %v288 = vrcp.pop %v287
        %v289 = vmul.f32 %v287, %v288
        %v290 = vsub.f32 1.0, %v289
        %v291 = vmul.f32 %v288, %v290
        %v292 = vadd.f32 %v288, %v291
        %vm293 = vweird.f32 %v287
        %vm294 = vweird.f32 %v288
        %vm295 = vmor %vm293, %vm294
        %v296 = vsel %vm295, %v288, %v292
        %v297 = vand.u32 2147483647, %v287
        %vm298 = vcmp.eq.f32.partialorder %v297, 8.507059e+37
        %v299 = vand.u32 %v287, 2147483648
        %v300 = vor.u32 1.1754944e-38, %v299
        %v301 = vsel %vm298, %v300, %v296
        %v302 = vmul.f32 1.0, %v301
        %v303 = vperm.slane %v302, 0
        %v304 = vlaneseq
        %v305 = vshrl.u32 %v304, 7
        %307 = vset.pattern.permute.xlu0 %v305
        %308 = vperm.xlu0 %307, %v303
        %v309 = vpop.permute.xlu0 %308
        %v310 = vlaneseq
        %v311 = vshrl.u32 %v310, 7
        %v312 = vadd.s32 %v311, 8
        %313 = vset.pattern.permute.xlu0 %v312
        %314 = vperm.xlu0 %313, %v303
        %v315 = vpop.permute.xlu0 %314
        %v316 = vlaneseq
        %v317 = vshrl.u32 %v316, 7
        %v318 = vadd.s32 %v317, 16
        %319 = vset.pattern.permute.xlu0 %v318
        %320 = vperm.xlu0 %319, %v303
        %v321 = vpop.permute.xlu0 %320
        %v322 = vlaneseq
        %v323 = vshrl.u32 %v322, 7
        %v324 = vadd.s32 %v323, 24
        %325 = vset.pattern.permute.xlu0 %v324
        %326 = vperm.xlu0 %325, %v303
        %v327 = vpop.permute.xlu0 %326
        %v328 = vadd.f32 %v208, 1.0
        %v329 = vadd.f32 %v209, 1.0
        %v330 = vadd.f32 %v210, 1.0
        %v331 = vadd.f32 %v211, 1.0
        %v332 = vadd.f32 %v212, 1.0
        %v333 = vadd.f32 %v213, 1.0
        %v334 = vadd.f32 %v214, 1.0
        %v335 = vadd.f32 %v215, 1.0
        %v336 = vmul.f32 %v328, %v309
        %v337 = vmul.f32 %v329, %v309
        %v338 = vmul.f32 %v330, %v315
        %v339 = vmul.f32 %v331, %v315
        %v340 = vmul.f32 %v332, %v321
        %v341 = vmul.f32 %v333, %v321
        %v342 = vmul.f32 %v334, %v327
        %v343 = vmul.f32 %v335, %v327
        %344 = vst [vmem:[%s207] sm:$0xff] %v336
        %345 = vst.msk [vmem:[%s207 + $0x8] sm:$0xff] %vm216, %v337
        %346 = vst [vmem:[%s207 + $0x10] sm:$0xff] %v338
        %347 = vst.msk [vmem:[%s207 + $0x18] sm:$0xff] %vm216, %v339
        %348 = vst [vmem:[%s207 + $0x20] sm:$0xff] %v340
        %349 = vst.msk [vmem:[%s207 + $0x28] sm:$0xff] %vm216, %v341
        %350 = vst [vmem:[%s207 + $0x30] sm:$0xff] %v342
        %351 = vst.msk [vmem:[%s207 + $0x38] sm:$0xff] %vm216, %v343
        %s352 = sand.u32 %s97, 1
        %s353 = scalar_lea.sflag [#allocation4], %s352
        %s354 = sand.u32 %s97, 1
        %s355 = smul.addr %s354, 64
        %s356 = scalar_lea.vmem [#allocation7], %s355
        // Predicated region
        $region41: #{tpu_custom_call.1} parent=31 // pred_check
          %p357 = pneg %p107
        $region42: #{tpu_custom_call.1} parent=31 // pred_check_branch
          %359 = sbr.rel (%p357) target = $region44
        $region43: #{tpu_custom_call.1} parent=31 // pred_region
          %361 = vsyncadd %s353, 0
          %s362 = smul.addr %s21, 8
          %s363 = smul.addr %s362, 8
          %s364 = scalar_lea.hbm %s3, %s363
          %s365 = sshll.u32 %s356, 4
          %s366 = int_to_ptr.vmem [resolvable:$true] %s365
          %s367 = sshll.u32 %s364, 4
          %s368 = int_to_ptr.hbm [resolvable:$true] %s367
          %373 = dma.vmem_to_hbm [thread:$0]  %s366, 1024, %s368, %s353, 256, 256, 16
        $region44: #{tpu_custom_call.1} parent=31 // pred_fallthru
          _
      $region32: #{tpu_custom_call.1} parent=5 // pred_fallthru
        _
      %p374 = scmp.le.s32.totalorder 2, %s16
      // Predicated region
      $region45: #{tpu_custom_call.1} parent=5 // pred_check
        %p375 = pneg %p374
      $region46: #{tpu_custom_call.1} parent=5 // pred_check_branch
        %377 = sbr.rel (%p375) target = $region48
      $region47: #{tpu_custom_call.1} parent=5 // pred_region
        %s378 = ssub.s32 %s16, 2
        // Predicated region
        $region49: #{tpu_custom_call.1} parent=47 // pred_check
          %p379 = pneg %p113
        $region50: #{tpu_custom_call.1} parent=47 // pred_check_branch
          %381 = sbr.rel (%p379) target = $region52
        $region51: #{tpu_custom_call.1} parent=47 // pred_region
          %s382 = sand.u32 %s98, 1
          %s383 = scalar_lea.sflag [#allocation4], %s382
          %s384 = sand.u32 %s98, 1
          %s385 = smul.addr %s384, 64
          %s386 = scalar_lea.vmem [#allocation7], %s385
          %388 = dma.done %s383, 1024
        $region52: #{tpu_custom_call.1} parent=47 // pred_fallthru
          _
      $region48: #{tpu_custom_call.1} parent=5 // pred_fallthru
        _
    $region6: #{tpu_custom_call.1} parent=1 // loop_footer
      %s20 = sadd.s32 1, %s16
    $region7: #{tpu_custom_call.1} parent=1 // loop_footer_branch
      %15 = sbr.rel target = $region3
    $region8: #{tpu_custom_call.1} parent=1 // loop_exit
      _
    %389 = vsyncpa [#allocation3], 1
    %s390 = scalar_lea.sflag [#allocation3], 1
    %391 = vsyncpa %s390, 1
    %392 = vsyncpa [#allocation6], 1
    %393 = vsyncpa [#allocation4], 1
    %s394 = scalar_lea.sflag [#allocation4], 1
    %395 = vsyncpa %s394, 1

</llo_original>
